<compile_context>
chip_gen: v6e
topology: v6e:2x2x1
jax: 0.10.0
libtpu: 0.0.40
codegen_flags: <defaults>
</compile_context>

<pallas_src>
import functools
import math

import jax
import jax.numpy as jnp
from jax.experimental import pallas as pl
from jax.experimental.pallas import tpu as pltpu

LN_EPS = 1e-5


def _round_up(n: int, m: int) -> int:
    return ((n + m - 1) // m) * m


def _vmem_limit_bytes() -> int:
    # ~25% headroom below physical VMEM: ~96 MiB on v5e/v6e (128 MiB),
    # ~48 MiB on v7x (64 MiB per TensorCore).
    try:
        return int(pltpu.get_tpu_info().vmem_capacity_bytes * 3 // 4)
    except Exception:
        return 48 * 1024 * 1024


def _ffn_kernel(x_ref, gamma_ref, beta_ref, w1_ref, b1_ref, w2_ref, b2_ref,
                o_ref, nrm_ref, acc_ref, *, d_real: int):
    f = pl.program_id(1)
    nf = pl.num_programs(1)

    # --- f == 0: LayerNorm + accumulator init (residual + Linear2 bias). -----
    @pl.when(f == 0)
    def _():
        x = x_ref[...].astype(jnp.float32)             # (tm, Dp)
        dp = x.shape[-1]
        inv_d = 1.0 / d_real
        # Padded lanes of x are zero, so the raw sum is already correct; only
        # the centered term needs masking before the variance reduction.
        mean = jnp.sum(x, axis=-1, keepdims=True) * inv_d
        centered = x - mean
        if dp != d_real:
            lane_mask = jax.lax.broadcasted_iota(jnp.int32, (1, dp), 1) < d_real
            centered = jnp.where(lane_mask, centered, 0.0)
        var = jnp.sum(centered * centered, axis=-1, keepdims=True) * inv_d
        inv = jax.lax.rsqrt(var + LN_EPS)
        # gamma/beta are zero in padded lanes -> normed is exactly 0 there.
        normed = centered * inv * gamma_ref[...] + beta_ref[...]
        nrm_ref[...] = normed                          # reused across f steps
        acc_ref[...] = normed + b2_ref[...]            # residual + output bias

    # --- every f step: one hidden-dim chunk of Linear1 -> GELU -> Linear2. ---
    normed_bf = nrm_ref[...].astype(jnp.bfloat16)
    h = jnp.dot(normed_bf, w1_ref[...],
                preferred_element_type=jnp.float32) + b1_ref[...]   # (tm, tf)
    # tanh-GELU: single EUP op per element; ~1e-3 deviation from exact erf.
    h = jax.nn.gelu(h, approximate=True)               # gelu(0) == 0 (pads ok)
    acc_ref[...] += jnp.dot(h.astype(jnp.bfloat16), w2_ref[...],
                            preferred_element_type=jnp.float32)

    @pl.when(f == nf - 1)
    def _():
        o_ref[...] = acc_ref[...].astype(o_ref.dtype)
    # TODO(synk): dropout1/dropout2 are identity here (inference semantics);
    # training-mode dropout would use pltpu.prng_random_bits + masking.


def prepare_params(gamma, beta, w1, b1, w2, b2, *, tf=512):
    """One-time lane-dense padding + bf16 cast of the FFN parameters.

    Hoisted out of the per-call wrapper so the pad/convert pass over the
    weight matrices is not paid on every forward call.
    """
    D, F = w1.shape
    Dp = _round_up(D, 128)
    tf = max(128, min(_round_up(tf, 128), _round_up(F, 128)))
    Fp = _round_up(F, tf)                 # hidden dim padded to a multiple of tf

    f32, bf16 = jnp.float32, jnp.bfloat16
    gamma_p = jnp.zeros((1, Dp), f32).at[0, :D].set(gamma.astype(f32))
    beta_p = jnp.zeros((1, Dp), f32).at[0, :D].set(beta.astype(f32))
    w1_p = jnp.zeros((Dp, Fp), bf16).at[:D, :F].set(w1.astype(bf16))
    b1_p = jnp.zeros((1, Fp), f32).at[0, :F].set(b1.astype(f32))
    w2_p = jnp.zeros((Fp, Dp), bf16).at[:F, :D].set(w2.astype(bf16))
    b2_p = jnp.zeros((1, Dp), f32).at[0, :D].set(b2.astype(f32))
    return dict(D=D, F=F, Dp=Dp, Fp=Fp, tf=tf,
                gamma=gamma_p, beta=beta_p, w1=w1_p, b1=b1_p, w2=w2_p, b2=b2_p)


def pre_ln_feedforward(x, params, *, tm=256):
    """x: (B, S, D). params: output of prepare_params(). Returns (B, S, D)."""
    B, S, D = x.shape
    assert D == params["D"], "params were prepared for a different embed dim"
    Dp, Fp, tf = params["Dp"], params["Fp"], params["tf"]
    rows = B * S

    # Rows padded only to the sublane multiple (8), never to tm; the cdiv grid
    # handles the ragged last row tile (OOB writes are masked by Pallas).
    rows_p = _round_up(rows, 8)
    x2d = x.reshape(rows, D)
    if rows_p != rows or Dp != D:
        x2d = jnp.pad(x2d.astype(jnp.float32),
                      ((0, rows_p - rows), (0, Dp - D)))
    else:
        x2d = x2d.astype(jnp.float32)     # no full padded copy when aligned

    # Row tile: multiple of 8, no larger than the padded row count; split into
    # >=2 row steps when possible so "parallel" can use both v7x TensorCores.
    tm = max(8, (min(tm, rows_p) // 8) * 8)
    if rows_p >= 16 and pl.cdiv(rows_p, tm) < 2:
        tm = _round_up(rows_p // 2, 8)
    grid = (pl.cdiv(rows_p, tm), Fp // tf)

    kernel = functools.partial(_ffn_kernel, d_real=D)

    # Advisory cost hint for XLA's scheduler around the custom call.
    flops = 2 * rows_p * Dp * Fp * 2                       # two matmuls
    bytes_accessed = (
        rows_p * Dp * 4 * 2                                # x in, out
        + (params["w1"].size + params["w2"].size) * 2      # bf16 weights
        + (params["gamma"].size + params["beta"].size
           + params["b1"].size + params["b2"].size) * 4)
    cost = pl.CostEstimate(flops=flops,
                           transcendentals=rows_p * Fp,    # tanh per hidden elem
                           bytes_accessed=bytes_accessed)

    out = pl.pallas_call(
        kernel,
        out_shape=jax.ShapeDtypeStruct((rows_p, Dp), x.dtype),
        grid_spec=pltpu.PrefetchScalarGridSpec(
            num_scalar_prefetch=0,
            grid=grid,
            in_specs=[
                pl.BlockSpec((tm, Dp), lambda i, f: (i, 0)),   # x row tile
                pl.BlockSpec((1, Dp), lambda i, f: (0, 0)),    # gamma
                pl.BlockSpec((1, Dp), lambda i, f: (0, 0)),    # beta
                pl.BlockSpec((Dp, tf), lambda i, f: (0, f)),   # W1 chunk (bf16)
                pl.BlockSpec((1, tf), lambda i, f: (0, f)),    # b1 chunk
                pl.BlockSpec((tf, Dp), lambda i, f: (f, 0)),   # W2 chunk (bf16)
                pl.BlockSpec((1, Dp), lambda i, f: (0, 0)),    # b2
            ],
            out_specs=pl.BlockSpec((tm, Dp), lambda i, f: (i, 0)),
            scratch_shapes=[
                pltpu.VMEM((tm, Dp), jnp.float32),   # normed (reused over f)
                pltpu.VMEM((tm, Dp), jnp.float32),   # f32 accumulator
            ],
        ),
        compiler_params=pltpu.CompilerParams(
            dimension_semantics=("parallel", "arbitrary"),
            vmem_limit_bytes=_vmem_limit_bytes(),
        ),
        cost_estimate=cost,
    )(x2d, params["gamma"], params["beta"], params["w1"], params["b1"],
      params["w2"], params["b2"])

    return out[:rows, :D].reshape(B, S, D)


def reference(x, gamma, beta, w1, b1, w2, b2):
    """Pure-JAX f32 reference of the PyTorch forward (eval mode, exact erf)."""
    xf = x.astype(jnp.float32)
    mean = jnp.mean(xf, axis=-1, keepdims=True)
    var = jnp.mean((xf - mean) ** 2, axis=-1, keepdims=True)
    normed = (xf - mean) / jnp.sqrt(var + LN_EPS) * gamma + beta
    h = jax.nn.gelu(normed @ w1 + b1, approximate=False)  # nn.GELU default
    return normed + (h @ w2 + b2)


if __name__ == "__main__":
    # Small shapes consistent with the module: (batch, seq, token_embed_dim)
    B, S, D, FF = 2, 8, 32, 64

    key = jax.random.PRNGKey(0)
    kx, kw1, kb1, kw2, kb2, kg, kbeta = jax.random.split(key, 7)

    x = jax.random.normal(kx, (B, S, D), dtype=jnp.float32)

    # PyTorch-like uniform init for the Linear layers; non-trivial LN affine.
    lim1 = 1.0 / math.sqrt(D)
    lim2 = 1.0 / math.sqrt(FF)
    w1 = jax.random.uniform(kw1, (D, FF), minval=-lim1, maxval=lim1, dtype=jnp.float32)
    b1 = jax.random.uniform(kb1, (FF,), minval=-lim1, maxval=lim1, dtype=jnp.float32)
    w2 = jax.random.uniform(kw2, (FF, D), minval=-lim2, maxval=lim2, dtype=jnp.float32)
    b2 = jax.random.uniform(kb2, (D,), minval=-lim2, maxval=lim2, dtype=jnp.float32)
    gamma = 1.0 + 0.1 * jax.random.normal(kg, (D,), dtype=jnp.float32)
    beta = 0.1 * jax.random.normal(kbeta, (D,), dtype=jnp.float32)

    params = prepare_params(gamma, beta, w1, b1, w2, b2)   # one-time weight prep
    out = pre_ln_feedforward(x, params)
    out = jax.block_until_ready(out)

    ref = reference(x, gamma, beta, w1, b1, w2, b2)
    assert out.shape == (B, S, D)
    # Tolerance sign-off: bf16 matmul operands (f32 accumulation) + tanh-GELU
    # approximation vs. exact erf (~1e-3 extra deviation).
    err = jnp.max(jnp.abs(out - ref))
    assert jnp.allclose(out, ref, atol=3e-2, rtol=3e-2), f"max abs err = {err}"

    print("KERNEL_OK")
</pallas_src>

<mosaic_0001>
module attributes {stable_mosaic.version = 11 : i64} {
  func.func @_ffn_kernel(%arg0: i32, %arg1: i32, %arg2: memref<8x128xf32, #tpu.memory_space<vmem>>, %arg3: memref<1x128xf32, #tpu.memory_space<vmem>>, %arg4: memref<1x128xf32, #tpu.memory_space<vmem>>, %arg5: memref<128x128xbf16, #tpu.memory_space<vmem>>, %arg6: memref<1x128xf32, #tpu.memory_space<vmem>>, %arg7: memref<128x128xbf16, #tpu.memory_space<vmem>>, %arg8: memref<1x128xf32, #tpu.memory_space<vmem>>, %arg9: memref<8x128xf32, #tpu.memory_space<vmem>>, %arg10: memref<8x128xf32, #tpu.memory_space<vmem>>, %arg11: memref<8x128xf32, #tpu.memory_space<vmem>>) attributes {dimension_semantics = [#tpu.dimension_semantics<parallel>, #tpu.dimension_semantics<arbitrary>], iteration_bounds = array<i64: 2, 1>, scalar_prefetch = 0 : i64, scratch_operands = 2 : i64, tpu.core_type = #tpu.core_type<tc>, window_params = [{transform_indices = @transform_0, window_bounds = array<i64: 8, 128>}, {pipeline_mode = #tpu.pipeline_mode<synchronous>, transform_indices = @transform_1, window_bounds = array<i64: 1, 128>}, {pipeline_mode = #tpu.pipeline_mode<synchronous>, transform_indices = @transform_2, window_bounds = array<i64: 1, 128>}, {transform_indices = @transform_3, window_bounds = array<i64: 128, 128>}, {transform_indices = @transform_4, window_bounds = array<i64: 1, 128>}, {transform_indices = @transform_5, window_bounds = array<i64: 128, 128>}, {pipeline_mode = #tpu.pipeline_mode<synchronous>, transform_indices = @transform_6, window_bounds = array<i64: 1, 128>}, {transform_indices = @transform_7, window_bounds = array<i64: 8, 128>}]} {
    %c0_i32 = arith.constant 0 : i32
    %0 = arith.cmpi eq, %arg1, %c0_i32 : i32
    %1 = arith.extui %0 : i1 to i32
    %c0_i32_0 = arith.constant 0 : i32
    %2 = arith.cmpi ne, %1, %c0_i32_0 : i32
    scf.if %2 {
      %c0_19 = arith.constant 0 : index
      %c0_20 = arith.constant 0 : index
      %32 = vector.load %arg2[%c0_19, %c0_20] : memref<8x128xf32, #tpu.memory_space<vmem>>, vector<8x128xf32>
      %cst_21 = arith.constant dense<0.000000e+00> : vector<8xf32>
      %33 = vector.multi_reduction <add>, %32, %cst_21 [1] : vector<8x128xf32> to vector<8xf32>
      %34 = vector.shape_cast %33 : vector<8xf32> to vector<8x1xf32>
      %cst_22 = arith.constant 3.125000e-02 : f32
      %35 = vector.broadcast %cst_22 : f32 to vector<8x1xf32>
      %36 = arith.mulf %34, %35 : vector<8x1xf32>
      %37 = vector.broadcast %36 : vector<8x1xf32> to vector<8x128xf32>
      %38 = arith.subf %32, %37 : vector<8x128xf32>
      %39 = tpu.iota {dimensions = array<i32: 1>} : vector<1x128xi32>
      %c32_i32 = arith.constant 32 : i32
      %40 = vector.broadcast %c32_i32 : i32 to vector<1x128xi32>
      %41 = arith.cmpi slt, %39, %40 : vector<1x128xi32>
      %cst_23 = arith.constant 0.000000e+00 : f32
      %42 = vector.shape_cast %41 : vector<1x128xi1> to vector<1x128xi1>
      %43 = vector.broadcast %42 : vector<1x128xi1> to vector<8x128xi1>
      %44 = vector.broadcast %cst_23 : f32 to vector<8x128xf32>
      %45 = arith.select %43, %38, %44 : vector<8x128xi1>, vector<8x128xf32>
      %46 = arith.mulf %45, %45 : vector<8x128xf32>
      %cst_24 = arith.constant dense<0.000000e+00> : vector<8xf32>
      %47 = vector.multi_reduction <add>, %46, %cst_24 [1] : vector<8x128xf32> to vector<8xf32>
      %48 = vector.shape_cast %47 : vector<8xf32> to vector<8x1xf32>
      %cst_25 = arith.constant 3.125000e-02 : f32
      %49 = vector.broadcast %cst_25 : f32 to vector<8x1xf32>
      %50 = arith.mulf %48, %49 : vector<8x1xf32>
      %cst_26 = arith.constant 9.99999974E-6 : f32
      %51 = vector.broadcast %cst_26 : f32 to vector<8x1xf32>
      %52 = arith.addf %50, %51 : vector<8x1xf32>
      %53 = math.rsqrt %52 : vector<8x1xf32>
      %54 = vector.broadcast %53 : vector<8x1xf32> to vector<8x128xf32>
      %55 = arith.mulf %45, %54 : vector<8x128xf32>
      %c0_27 = arith.constant 0 : index
      %c0_28 = arith.constant 0 : index
      %56 = vector.load %arg3[%c0_27, %c0_28] : memref<1x128xf32, #tpu.memory_space<vmem>>, vector<1x128xf32>
      %57 = vector.broadcast %56 : vector<1x128xf32> to vector<8x128xf32>
      %58 = arith.mulf %55, %57 : vector<8x128xf32>
      %c0_29 = arith.constant 0 : index
      %c0_30 = arith.constant 0 : index
      %59 = vector.load %arg4[%c0_29, %c0_30] : memref<1x128xf32, #tpu.memory_space<vmem>>, vector<1x128xf32>
      %60 = vector.broadcast %59 : vector<1x128xf32> to vector<8x128xf32>
      %61 = arith.addf %58, %60 : vector<8x128xf32>
      %c0_31 = arith.constant 0 : index
      %c0_32 = arith.constant 0 : index
      %62 = vector.load %arg10[%c0_31, %c0_32] : memref<8x128xf32, #tpu.memory_space<vmem>>, vector<8x128xf32>
      tpu.vector_store %arg10[%c0_31, %c0_32], %61 {strides = array<i32>} : memref<8x128xf32, #tpu.memory_space<vmem>>, vector<8x128xf32>,
      %c0_33 = arith.constant 0 : index
      %c0_34 = arith.constant 0 : index
      %63 = vector.load %arg8[%c0_33, %c0_34] : memref<1x128xf32, #tpu.memory_space<vmem>>, vector<1x128xf32>
      %64 = vector.broadcast %63 : vector<1x128xf32> to vector<8x128xf32>
      %65 = arith.addf %61, %64 : vector<8x128xf32>
      %c0_35 = arith.constant 0 : index
      %c0_36 = arith.constant 0 : index
      %66 = vector.load %arg11[%c0_35, %c0_36] : memref<8x128xf32, #tpu.memory_space<vmem>>, vector<8x128xf32>
      tpu.vector_store %arg11[%c0_35, %c0_36], %65 {strides = array<i32>} : memref<8x128xf32, #tpu.memory_space<vmem>>, vector<8x128xf32>,
    } else {
    }
    %c0 = arith.constant 0 : index
    %c0_1 = arith.constant 0 : index
    %3 = vector.load %arg10[%c0, %c0_1] : memref<8x128xf32, #tpu.memory_space<vmem>>, vector<8x128xf32>
    %4 = arith.truncf %3 : vector<8x128xf32> to vector<8x128xbf16>
    %c0_2 = arith.constant 0 : index
    %c0_3 = arith.constant 0 : index
    %5 = vector.load %arg5[%c0_2, %c0_3] : memref<128x128xbf16, #tpu.memory_space<vmem>>, vector<128x128xbf16>
    %cst = arith.constant dense<0.000000e+00> : vector<8x128xf32>
    %6 = tpu.matmul %4, %5, %cst {dimension_numbers = #tpu.dot_dimension_numbers<[1], [0], [0], [1], [0, 0, 1, 1], [], []>} : vector<8x128xbf16>, vector<128x128xbf16>, vector<8x128xf32> -> vector<8x128xf32>
    %c0_4 = arith.constant 0 : index
    %c0_5 = arith.constant 0 : index
    %7 = vector.load %arg6[%c0_4, %c0_5] : memref<1x128xf32, #tpu.memory_space<vmem>>, vector<1x128xf32>
    %8 = vector.broadcast %7 : vector<1x128xf32> to vector<8x128xf32>
    %9 = arith.addf %6, %8 : vector<8x128xf32>
    %10 = arith.mulf %9, %9 : vector<8x128xf32>
    %11 = arith.mulf %9, %10 : vector<8x128xf32>
    %cst_6 = arith.constant 4.471500e-02 : f32
    %12 = vector.broadcast %cst_6 : f32 to vector<8x128xf32>
    %13 = arith.mulf %12, %11 : vector<8x128xf32>
    %14 = arith.addf %9, %13 : vector<8x128xf32>
    %cst_7 = arith.constant 0.797884583 : f32
    %15 = vector.broadcast %cst_7 : f32 to vector<8x128xf32>
    %16 = arith.mulf %15, %14 : vector<8x128xf32>
    %17 = math.tanh %16 : vector<8x128xf32>
    %cst_8 = arith.constant 1.000000e+00 : f32
    %18 = vector.broadcast %cst_8 : f32 to vector<8x128xf32>
    %19 = arith.addf %18, %17 : vector<8x128xf32>
    %cst_9 = arith.constant 5.000000e-01 : f32
    %20 = vector.broadcast %cst_9 : f32 to vector<8x128xf32>
    %21 = arith.mulf %20, %19 : vector<8x128xf32>
    %22 = arith.mulf %9, %21 : vector<8x128xf32>
    %c0_10 = arith.constant 0 : index
    %c0_11 = arith.constant 0 : index
    %23 = vector.load %arg11[%c0_10, %c0_11] : memref<8x128xf32, #tpu.memory_space<vmem>>, vector<8x128xf32>
    %24 = arith.truncf %22 : vector<8x128xf32> to vector<8x128xbf16>
    %c0_12 = arith.constant 0 : index
    %c0_13 = arith.constant 0 : index
    %25 = vector.load %arg7[%c0_12, %c0_13] : memref<128x128xbf16, #tpu.memory_space<vmem>>, vector<128x128xbf16>
    %cst_14 = arith.constant dense<0.000000e+00> : vector<8x128xf32>
    %26 = tpu.matmul %24, %25, %cst_14 {dimension_numbers = #tpu.dot_dimension_numbers<[1], [0], [0], [1], [0, 0, 1, 1], [], []>} : vector<8x128xbf16>, vector<128x128xbf16>, vector<8x128xf32> -> vector<8x128xf32>
    %27 = arith.addf %23, %26 : vector<8x128xf32>
    %c0_15 = arith.constant 0 : index
    %c0_16 = arith.constant 0 : index
    %28 = vector.load %arg11[%c0_15, %c0_16] : memref<8x128xf32, #tpu.memory_space<vmem>>, vector<8x128xf32>
    tpu.vector_store %arg11[%c0_15, %c0_16], %27 {strides = array<i32>} : memref<8x128xf32, #tpu.memory_space<vmem>>, vector<8x128xf32>,
    %c0_i32_17 = arith.constant 0 : i32
    %29 = arith.cmpi eq, %arg1, %c0_i32_17 : i32
    %30 = arith.extui %29 : i1 to i32
    %c0_i32_18 = arith.constant 0 : i32
    %31 = arith.cmpi ne, %30, %c0_i32_18 : i32
    scf.if %31 {
      %c0_19 = arith.constant 0 : index
      %c0_20 = arith.constant 0 : index
      %32 = vector.load %arg11[%c0_19, %c0_20] : memref<8x128xf32, #tpu.memory_space<vmem>>, vector<8x128xf32>
      %c0_21 = arith.constant 0 : index
      %c0_22 = arith.constant 0 : index
      %33 = vector.load %arg9[%c0_21, %c0_22] : memref<8x128xf32, #tpu.memory_space<vmem>>, vector<8x128xf32>
      tpu.vector_store %arg9[%c0_21, %c0_22], %32 {strides = array<i32>} : memref<8x128xf32, #tpu.memory_space<vmem>>, vector<8x128xf32>,
    } else {
    }
    return
  }
  func.func @transform_0(%arg0: i32, %arg1: i32) -> (i32, i32) {
    %c0_i32 = arith.constant 0 : i32
    %c0_i32_0 = arith.constant 0 : i32
    return %arg0, %c0_i32 : i32, i32
  }
  func.func @transform_1(%arg0: i32, %arg1: i32) -> (i32, i32) {
    %c0_i32 = arith.constant 0 : i32
    %c0_i32_0 = arith.constant 0 : i32
    %c0_i32_1 = arith.constant 0 : i32
    return %c0_i32, %c0_i32_0 : i32, i32
  }
  func.func @transform_2(%arg0: i32, %arg1: i32) -> (i32, i32) {
    %c0_i32 = arith.constant 0 : i32
    %c0_i32_0 = arith.constant 0 : i32
    %c0_i32_1 = arith.constant 0 : i32
    return %c0_i32, %c0_i32_0 : i32, i32
  }
  func.func @transform_3(%arg0: i32, %arg1: i32) -> (i32, i32) {
    %c0_i32 = arith.constant 0 : i32
    %c0_i32_0 = arith.constant 0 : i32
    return %c0_i32, %arg1 : i32, i32
  }
  func.func @transform_4(%arg0: i32, %arg1: i32) -> (i32, i32) {
    %c0_i32 = arith.constant 0 : i32
    %c0_i32_0 = arith.constant 0 : i32
    return %c0_i32, %arg1 : i32, i32
  }
  func.func @transform_5(%arg0: i32, %arg1: i32) -> (i32, i32) {
    %c0_i32 = arith.constant 0 : i32
    %c0_i32_0 = arith.constant 0 : i32
    return %arg1, %c0_i32 : i32, i32
  }
  func.func @transform_6(%arg0: i32, %arg1: i32) -> (i32, i32) {
    %c0_i32 = arith.constant 0 : i32
    %c0_i32_0 = arith.constant 0 : i32
    %c0_i32_1 = arith.constant 0 : i32
    return %c0_i32, %c0_i32_0 : i32, i32
  }
  func.func @transform_7(%arg0: i32, %arg1: i32) -> (i32, i32) {
    %c0_i32 = arith.constant 0 : i32
    %c0_i32_0 = arith.constant 0 : i32
    return %arg0, %c0_i32 : i32, i32
  }
}

</mosaic_0001>

<llo_original>
// kernel: tpu_custom_call.1
$region0: #{tpu_custom_call.1}
  #allocation0 [shape = 'u32[]', space=smem, size = 0x4, offset = 0x4, fixed_abs, tag = 'smem constant byte address 0x4 - core index']
  #allocation1 [shape = 'u32[144,128]{1,0:T(1,128)}', space=vmem, size = 0x12000, scoped, tag = 'internal scratch']
  #allocation2 [shape = 'f32[8,128]{1,0:T(8,128)}', space=vmem, size = 0x1000, scoped, tag = 'scratch operand']
  #allocation3 [shape = 'f32[8,128]{1,0:T(8,128)}', space=vmem, size = 0x1000, scoped, tag = 'scratch operand']
  %s0 = inlined_call_operand.hbm [shape: f32[16,128], index: 0, kind: input, shape index: {}]
  %s1 = inlined_call_operand.vmem [shape: f32[1,128], index: 1, kind: input, shape index: {}]
  %s2 = inlined_call_operand.vmem [shape: f32[1,128], index: 2, kind: input, shape index: {}]
  %s3 = inlined_call_operand.hbm [shape: bf16[128,128], index: 3, kind: input, shape index: {}]
  %s4 = inlined_call_operand.vmem [shape: f32[1,128], index: 4, kind: input, shape index: {}]
  %s5 = inlined_call_operand.hbm [shape: bf16[128,128], index: 5, kind: input, shape index: {}]
  %s6 = inlined_call_operand.vmem [shape: f32[1,128], index: 6, kind: input, shape index: {}]
  %s7 = inlined_call_operand.hbm [shape: f32[16,128], index: 7, kind: output, shape index: {}]
  %s8 = sld [smem:[#allocation0]]
  $region81: #{tpu_custom_call.1} parent=0
    _
  %s10 = ssub.s32 1, %s8
  %s11 = scalar_select 0, %s10, %s8
  $region1: #{tpu_custom_call.1} parent=0
    #allocation4 [shape = 'u8[8192]{0}', space=vmem, size = 0x2000, scoped, tag = 'input window, operand 0']
    #allocation5 [shape = 's32[2]{0}', space=sflag, size = 0x8, scoped, tag = 'scoped memory for tpu_custom_call.1']
    #allocation6 [shape = 's32[2]{0}', space=sflag, size = 0x8, scoped, tag = 'scoped memory for tpu_custom_call.1']
    #allocation7 [shape = 'u8[32768]{0}', space=vmem, size = 0x8000, scoped, tag = 'input window, operand 3, single buffered']
    #allocation8 [shape = 's32[1]{0}', space=sflag, size = 0x4, scoped, tag = 'scoped memory for tpu_custom_call.1']
    #allocation9 [shape = 'u8[32768]{0}', space=vmem, size = 0x8000, scoped, tag = 'input window, operand 5, single buffered']
    #allocation10 [shape = 'u8[8192]{0}', space=vmem, size = 0x2000, scoped, tag = 'output window, operand 0']
    %12 = vsyncpa [#allocation5], 0
    %s13 = scalar_lea.sflag [#allocation5], 1
    %14 = vsyncpa %s13, 0
    %15 = vsyncpa [#allocation8], 0
    %16 = vsyncpa [#allocation6], 0
    %s17 = scalar_lea.sflag [#allocation6], 1
    %18 = vsyncpa %s17, 0
    loop: start=0, step=1, limit=4
    $region2: #{tpu_custom_call.1} parent=1 // loop_pre_header
      _
    $region3: #{tpu_custom_call.1} parent=1 // loop_header
      %s20 = sphi 0, %s24
      %p21 = scmp.ge.s32.totalorder %s20, 4
      %s27 = sphi 0, %s39
      %s28 = sphi 0, %s35
      %s29 = sphi 0, %s27
      %s30 = sphi 0, %s28
      %s31 = sphi 0, %s29
      %s32 = sphi 0, %s30
      %s42 = sphi 0, %s44
      %s45 = sphi 0, %s42
      %s46 = sphi 0, %s45
      %s62 = sphi 0, %s46
      %s66 = sphi 0, %s66
      %s68 = sphi 0, %s66
      %s69 = sphi 0, %s68
      %s83 = sphi 0, %s69
      %s87 = sphi 0, %s87
      %s89 = sphi 0, %s87
      %s90 = sphi 0, %s89
      %s104 = sphi 0, %s90
      %s110 = sphi 0, %s112
      %s113 = sphi 0, %s110
      %s114 = sphi 0, %s113
      %s130 = sphi 0, %s114
      %s136 = sphi 0, %s138
      %s139 = sphi 0, %s136
      %s140 = sphi 0, %s139
      %s156 = sphi 0, %s140
      %s162 = sphi 0, %s164
      %s165 = sphi 0, %s162
      %s166 = sphi 0, %s165
      %s182 = sphi 0, %s166
      %s186 = sphi 0, %s186
      %s188 = sphi 0, %s186
      %s189 = sphi 0, %s188
      %s203 = sphi 0, %s189
      %s209 = sphi 0, %s211
      %s212 = sphi 0, %s209
      %s213 = sphi 0, %s212
      %s229 = sphi 0, %s213
    $region4: #{tpu_custom_call.1} parent=1 // loop_header_branch
      %23 = sbr.rel (%p21) target = $region8
    $region5: #{tpu_custom_call.1} parent=1 // loop_body
      %s25 = ssub.s32 %s20, 1
      %s26 = ssub.s32 %s20, 2
      %s33 = sadd.s32 1, %s28
      %p34 = scmp.ge.s32.totalorder %s33, 1
      %s35 = scalar_select %p34, 0, %s33
      %s36 = sadd.s32 1, %s27
      %s37 = scalar_select %p34, %s36, %s27
      %p38 = scmp.ge.s32.totalorder %s37, 2
      %s39 = scalar_select %p38, 0, %s37
      %s40 = ssub.s32 %s27, %s39
      %p41 = scmp.eq.s32.totalorder %s40, 0
      %s43 = sadd.s32 %s42, 1
      %s44 = scalar_select %p41, %s42, %s43
      %p47 = pneg %p41
      %p48 = scmp.eq.s32.totalorder %s20, 1
      %p49 = por %p47, %p48
      %p50 = scmp.ne.s32.totalorder %s42, %s45
      %p51 = scmp.eq.s32.totalorder %s20, 0
      %p52 = por %p50, %p51
      %p53 = scmp.ne.s32.totalorder %s42, %s45
      %p54 = scmp.eq.s32.totalorder %s25, 1
      %p55 = por %p53, %p54
      %p56 = scmp.ne.s32.totalorder %s45, %s46
      %p57 = scmp.eq.s32.totalorder %s25, 0
      %p58 = por %p56, %p57
      %p59 = scmp.ne.s32.totalorder %s45, %s46
      %p60 = scmp.eq.s32.totalorder %s26, 1
      %p61 = por %p59, %p60
      %p63 = scmp.ne.s32.totalorder %s46, %s62
      %p64 = scmp.eq.s32.totalorder %s26, 0
      %p65 = por %p63, %p64
      %s67 = sadd.s32 %s66, 1
      %p70 = scmp.eq.s32.totalorder %s20, 1
      %p71 = scmp.ne.s32.totalorder %s66, %s68
      %p72 = scmp.eq.s32.totalorder %s20, 0
      %p73 = por %p71, %p72
      %p74 = scmp.ne.s32.totalorder %s66, %s68
      %p75 = scmp.eq.s32.totalorder %s25, 1
      %p76 = por %p74, %p75
      %p77 = scmp.ne.s32.totalorder %s68, %s69
      %p78 = scmp.eq.s32.totalorder %s25, 0
      %p79 = por %p77, %p78
      %p80 = scmp.ne.s32.totalorder %s68, %s69
      %p81 = scmp.eq.s32.totalorder %s26, 1
      %p82 = por %p80, %p81
      %p84 = scmp.ne.s32.totalorder %s69, %s83
      %p85 = scmp.eq.s32.totalorder %s26, 0
      %p86 = por %p84, %p85
      %s88 = sadd.s32 %s87, 1
      %p91 = scmp.eq.s32.totalorder %s20, 1
      %p92 = scmp.ne.s32.totalorder %s87, %s89
      %p93 = scmp.eq.s32.totalorder %s20, 0
      %p94 = por %p92, %p93
      %p95 = scmp.ne.s32.totalorder %s87, %s89
      %p96 = scmp.eq.s32.totalorder %s25, 1
      %p97 = por %p95, %p96
      %p98 = scmp.ne.s32.totalorder %s89, %s90
      %p99 = scmp.eq.s32.totalorder %s25, 0
      %p100 = por %p98, %p99
      %p101 = scmp.ne.s32.totalorder %s89, %s90
      %p102 = scmp.eq.s32.totalorder %s26, 1
      %p103 = por %p101, %p102
      %p105 = scmp.ne.s32.totalorder %s90, %s104
      %p106 = scmp.eq.s32.totalorder %s26, 0
      %p107 = por %p105, %p106
      %s108 = ssub.s32 %s28, %s35
      %p109 = scmp.eq.s32.totalorder %s108, 0
      %s111 = sadd.s32 %s110, 1
      %s112 = scalar_select %p109, %s110, %s111
      %p115 = pneg %p109
      %p116 = scmp.eq.s32.totalorder %s20, 1
      %p117 = por %p115, %p116
      %p118 = scmp.ne.s32.totalorder %s110, %s113
      %p119 = scmp.eq.s32.totalorder %s20, 0
      %p120 = por %p118, %p119
      %p121 = scmp.ne.s32.totalorder %s110, %s113
      %p122 = scmp.eq.s32.totalorder %s25, 1
      %p123 = por %p121, %p122
      %p124 = scmp.ne.s32.totalorder %s113, %s114
      %p125 = scmp.eq.s32.totalorder %s25, 0
      %p126 = por %p124, %p125
      %p127 = scmp.ne.s32.totalorder %s113, %s114
      %p128 = scmp.eq.s32.totalorder %s26, 1
      %p129 = por %p127, %p128
      %p131 = scmp.ne.s32.totalorder %s114, %s130
      %p132 = scmp.eq.s32.totalorder %s26, 0
      %p133 = por %p131, %p132
      %s134 = ssub.s32 %s28, %s35
      %p135 = scmp.eq.s32.totalorder %s134, 0
      %s137 = sadd.s32 %s136, 1
      %s138 = scalar_select %p135, %s136, %s137
      %p141 = pneg %p135
      %p142 = scmp.eq.s32.totalorder %s20, 1
      %p143 = por %p141, %p142
      %p144 = scmp.ne.s32.totalorder %s136, %s139
      %p145 = scmp.eq.s32.totalorder %s20, 0
      %p146 = por %p144, %p145
      %p147 = scmp.ne.s32.totalorder %s136, %s139
      %p148 = scmp.eq.s32.totalorder %s25, 1
      %p149 = por %p147, %p148
      %p150 = scmp.ne.s32.totalorder %s139, %s140
      %p151 = scmp.eq.s32.totalorder %s25, 0
      %p152 = por %p150, %p151
      %p153 = scmp.ne.s32.totalorder %s139, %s140
      %p154 = scmp.eq.s32.totalorder %s26, 1
      %p155 = por %p153, %p154
      %p157 = scmp.ne.s32.totalorder %s140, %s156
      %p158 = scmp.eq.s32.totalorder %s26, 0
      %p159 = por %p157, %p158
      %s160 = ssub.s32 %s28, %s35
      %p161 = scmp.eq.s32.totalorder %s160, 0
      %s163 = sadd.s32 %s162, 1
      %s164 = scalar_select %p161, %s162, %s163
      %p167 = pneg %p161
      %p168 = scmp.eq.s32.totalorder %s20, 1
      %p169 = por %p167, %p168
      %p170 = scmp.ne.s32.totalorder %s162, %s165
      %p171 = scmp.eq.s32.totalorder %s20, 0
      %p172 = por %p170, %p171
      %p173 = scmp.ne.s32.totalorder %s162, %s165
      %p174 = scmp.eq.s32.totalorder %s25, 1
      %p175 = por %p173, %p174
      %p176 = scmp.ne.s32.totalorder %s165, %s166
      %p177 = scmp.eq.s32.totalorder %s25, 0
      %p178 = por %p176, %p177
      %p179 = scmp.ne.s32.totalorder %s165, %s166
      %p180 = scmp.eq.s32.totalorder %s26, 1
      %p181 = por %p179, %p180
      %p183 = scmp.ne.s32.totalorder %s166, %s182
      %p184 = scmp.eq.s32.totalorder %s26, 0
      %p185 = por %p183, %p184
      %s187 = sadd.s32 %s186, 1
      %p190 = scmp.eq.s32.totalorder %s20, 1
      %p191 = scmp.ne.s32.totalorder %s186, %s188
      %p192 = scmp.eq.s32.totalorder %s20, 0
      %p193 = por %p191, %p192
      %p194 = scmp.ne.s32.totalorder %s186, %s188
      %p195 = scmp.eq.s32.totalorder %s25, 1
      %p196 = por %p194, %p195
      %p197 = scmp.ne.s32.totalorder %s188, %s189
      %p198 = scmp.eq.s32.totalorder %s25, 0
      %p199 = por %p197, %p198
      %p200 = scmp.ne.s32.totalorder %s188, %s189
      %p201 = scmp.eq.s32.totalorder %s26, 1
      %p202 = por %p200, %p201
      %p204 = scmp.ne.s32.totalorder %s189, %s203
      %p205 = scmp.eq.s32.totalorder %s26, 0
      %p206 = por %p204, %p205
      %s207 = ssub.s32 %s27, %s39
      %p208 = scmp.eq.s32.totalorder %s207, 0
      %s210 = sadd.s32 %s209, 1
      %s211 = scalar_select %p208, %s209, %s210
      %p214 = pneg %p208
      %p215 = scmp.eq.s32.totalorder %s20, 1
      %p216 = por %p214, %p215
      %p217 = scmp.ne.s32.totalorder %s209, %s212
      %p218 = scmp.eq.s32.totalorder %s20, 0
      %p219 = por %p217, %p218
      %p220 = scmp.ne.s32.totalorder %s209, %s212
      %p221 = scmp.eq.s32.totalorder %s25, 1
      %p222 = por %p220, %p221
      %p223 = scmp.ne.s32.totalorder %s212, %s213
      %p224 = scmp.eq.s32.totalorder %s25, 0
      %p225 = por %p223, %p224
      %p226 = scmp.ne.s32.totalorder %s212, %s213
      %p227 = scmp.eq.s32.totalorder %s26, 1
      %p228 = por %p226, %p227
      %p230 = scmp.ne.s32.totalorder %s213, %s229
      %p231 = scmp.eq.s32.totalorder %s26, 0
      %p232 = por %p230, %p231
      %p233 = scmp.le.s32.totalorder 1, %s20
      %p234 = scmp.lt.s32.totalorder %s20, 3
      %p235 = pnand %p233, %p234
      %p236 = pneg %p235
      // Predicated region
      $region9: #{tpu_custom_call.1} parent=5 // pred_check
        _
      $region10: #{tpu_custom_call.1} parent=5 // pred_check_branch
        %238 = sbr.rel (%p235) target = $region12
      $region11: #{tpu_custom_call.1} parent=5 // pred_region
        %s239 = ssub.s32 %s20, 1
        // Predicated region
        $region13: #{tpu_custom_call.1} parent=11 // pred_check
          %p240 = pneg %p79
        $region14: #{tpu_custom_call.1} parent=11 // pred_check_branch
          %242 = sbr.rel (%p240) target = $region16
        $region15: #{tpu_custom_call.1} parent=11 // pred_region
          _
        $region16: #{tpu_custom_call.1} parent=11 // pred_fallthru
          _
        // Predicated region
        $region17: #{tpu_custom_call.1} parent=11 // pred_check
          %p243 = pneg %p100
        $region18: #{tpu_custom_call.1} parent=11 // pred_check_branch
          %245 = sbr.rel (%p243) target = $region20
        $region19: #{tpu_custom_call.1} parent=11 // pred_region
          _
        $region20: #{tpu_custom_call.1} parent=11 // pred_fallthru
          _
        // Predicated region
        $region21: #{tpu_custom_call.1} parent=11 // pred_check
          %p246 = pneg %p126
        $region22: #{tpu_custom_call.1} parent=11 // pred_check_branch
          %248 = sbr.rel (%p246) target = $region24
        $region23: #{tpu_custom_call.1} parent=11 // pred_region
          %s250 = ssub.s32 1024, 1024
          %251 = vsyncadd [#allocation8], %s250
          %s252 = smul.addr %s30, 64
          %s253 = scalar_lea.hbm %s3, %s252
          %s254 = sshll.u32 [#allocation7], 4
          %s255 = int_to_ptr.vmem [resolvable:$true] %s254
          %260 = dma.hbm_to_vmem [thread:$0]  %s253, 1024, %s255, [#allocation8], 64, 64, 4
        $region24: #{tpu_custom_call.1} parent=11 // pred_fallthru
          _
        // Predicated region
        $region25: #{tpu_custom_call.1} parent=11 // pred_check
          %p261 = pneg %p152
        $region26: #{tpu_custom_call.1} parent=11 // pred_check_branch
          %263 = sbr.rel (%p261) target = $region28
        $region27: #{tpu_custom_call.1} parent=11 // pred_region
          %p264 = scmp.lt.s32.totalorder %s30, 0
          %s265 = scalar_select %p264, %s30, 0
          %s266 = scalar_lea.vmem %s4, %s265
        $region28: #{tpu_custom_call.1} parent=11 // pred_fallthru
          _
        // Predicated region
        $region29: #{tpu_custom_call.1} parent=11 // pred_check
          %p267 = pneg %p178
        $region30: #{tpu_custom_call.1} parent=11 // pred_check_branch
          %269 = sbr.rel (%p267) target = $region32
        $region31: #{tpu_custom_call.1} parent=11 // pred_region
          %s270 = smul.u32 16, %s30
          %s272 = ssub.s32 1024, 1024
          %273 = vsyncadd [#allocation8], %s272
          %s274 = smul.addr %s270, 64
          %s275 = scalar_lea.hbm %s5, %s274
          %s276 = sshll.u32 [#allocation9], 4
          %s277 = int_to_ptr.vmem [resolvable:$true] %s276
          %282 = dma.hbm_to_vmem [thread:$0]  %s275, 1024, %s277, [#allocation8], 64, 64, 4
        $region32: #{tpu_custom_call.1} parent=11 // pred_fallthru
          _
        // Predicated region
        $region33: #{tpu_custom_call.1} parent=11 // pred_check
          %p283 = pneg %p199
        $region34: #{tpu_custom_call.1} parent=11 // pred_check_branch
          %285 = sbr.rel (%p283) target = $region36
        $region35: #{tpu_custom_call.1} parent=11 // pred_region
          _
        $region36: #{tpu_custom_call.1} parent=11 // pred_fallthru
          _
      $region12: #{tpu_custom_call.1} parent=5 // pred_fallthru
        _
      %p286 = scmp.lt.s32.totalorder %s20, 2
      // Predicated region
      $region37: #{tpu_custom_call.1} parent=5 // pred_check
        %p287 = pneg %p286
      $region38: #{tpu_custom_call.1} parent=5 // pred_check_branch
        %289 = sbr.rel (%p287) target = $region40
      $region39: #{tpu_custom_call.1} parent=5 // pred_region
        // Predicated region
        $region41: #{tpu_custom_call.1} parent=39 // pred_check
          %p290 = pneg %p52
        $region42: #{tpu_custom_call.1} parent=39 // pred_check_branch
          %292 = sbr.rel (%p290) target = $region44
        $region43: #{tpu_custom_call.1} parent=39 // pred_region
          %s293 = sand.u32 %s42, 1
          %s294 = scalar_lea.sflag [#allocation5], %s293
          %s295 = sand.u32 %s42, 1
          %s296 = smul.addr %s295, 8
          %s297 = scalar_lea.vmem [#allocation4], %s296
          %s299 = ssub.s32 128, 128
          %300 = vsyncadd %s294, %s299
          %s301 = smul.addr %s27, 128
          %s302 = scalar_lea.hbm %s0, %s301
          %s304 = sshll.u32 %s297, 4
          %s305 = int_to_ptr.vmem [resolvable:$true] %s304
          %307 = dma.hbm_to_vmem [thread:$0]  %s302, 128, %s305, %s294
        $region44: #{tpu_custom_call.1} parent=39 // pred_fallthru
          _
      $region40: #{tpu_custom_call.1} parent=5 // pred_fallthru
        _
      %p308 = scmp.le.s32.totalorder 1, %s20
      %p309 = scmp.lt.s32.totalorder %s20, 3
      %p310 = pnand %p308, %p309
      %p311 = pneg %p310
      // Predicated region
      $region45: #{tpu_custom_call.1} parent=5 // pred_check
        _
      $region46: #{tpu_custom_call.1} parent=5 // pred_check_branch
        %313 = sbr.rel (%p310) target = $region48
      $region47: #{tpu_custom_call.1} parent=5 // pred_region
        %s314 = ssub.s32 %s20, 1
        %s315 = sand.u32 %s45, 1
        %s316 = scalar_lea.sflag [#allocation5], %s315
        %s317 = sand.u32 %s45, 1
        %s318 = smul.addr %s317, 8
        %s319 = scalar_lea.vmem [#allocation4], %s318
        // Predicated region
        $region49: #{tpu_custom_call.1} parent=47 // pred_check
          %p320 = pneg %p58
        $region50: #{tpu_custom_call.1} parent=47 // pred_check_branch
          %322 = sbr.rel (%p320) target = $region52
        $region51: #{tpu_custom_call.1} parent=47 // pred_region
          %323 = dma.done %s316, 128
        $region52: #{tpu_custom_call.1} parent=47 // pred_fallthru
          _
        // Predicated region
        $region53: #{tpu_custom_call.1} parent=47 // pred_check
          %p324 = pneg %p126
        $region54: #{tpu_custom_call.1} parent=47 // pred_check_branch
          %326 = sbr.rel (%p324) target = $region56
        $region55: #{tpu_custom_call.1} parent=47 // pred_region
          %327 = dma.done [#allocation8], 1024
        $region56: #{tpu_custom_call.1} parent=47 // pred_fallthru
          _
        // Predicated region
        $region57: #{tpu_custom_call.1} parent=47 // pred_check
          %p328 = pneg %p178
        $region58: #{tpu_custom_call.1} parent=47 // pred_check_branch
          %330 = sbr.rel (%p328) target = $region60
        $region59: #{tpu_custom_call.1} parent=47 // pred_region
          %331 = dma.done [#allocation8], 1024
        $region60: #{tpu_custom_call.1} parent=47 // pred_fallthru
          _
        %s332 = sand.u32 %s45, 1
        %s333 = scalar_lea.sflag [#allocation5], %s332
        %s334 = sand.u32 %s45, 1
        %s335 = smul.addr %s334, 8
        %s336 = scalar_lea.vmem [#allocation4], %s335
        %p337 = pneg %p58
        %p338 = pneg %p55
        %p339 = pneg %p79
        %p340 = pneg %p76
        %p341 = pneg %p100
        %p342 = pneg %p97
        %p343 = pneg %p126
        %p344 = pneg %p123
        %p345 = scmp.lt.s32.totalorder %s30, 0
        %s346 = scalar_select %p345, %s30, 0
        %s347 = scalar_lea.vmem %s4, %s346
        %p348 = pneg %p152
        %p349 = pneg %p149
        %p350 = pneg %p178
        %p351 = pneg %p175
        %p352 = pneg %p199
        %p353 = pneg %p196
        %p354 = pneg %p225
        %p355 = pneg %p222
        %s356 = sand.u32 %s212, 1
        %s357 = scalar_lea.sflag [#allocation6], %s356
        %s358 = sand.u32 %s212, 1
        %s359 = smul.addr %s358, 8
        %s360 = scalar_lea.vmem [#allocation10], %s359
        %p361 = scmp.lt.s32.totalorder %s30, 0
        %s362 = scalar_select %p361, %s30, 0
        %s363 = scalar_lea.vmem %s4, %s362
        %s364 = smul.u32 16, %s30
        %p366 = scmp.eq.s32.totalorder %s30, 0
        // Predicated region
        $region61: #{tpu_custom_call.1} parent=47 // pred_check
          %p367 = pneg %p366
        $region62: #{tpu_custom_call.1} parent=47 // pred_check_branch
          %369 = sbr.rel (%p367) target = $region64
        $region63: #{tpu_custom_call.1} parent=47 // pred_region
          %v370 = vld [vmem:[%s319] sm:$0xff]
          %371 = vadd.xlane.f32.xlu0 %v370
          %v372 = vpop.xlane.xlu0 %371
          %v373 = vmul.f32 %v372, 0.03125
          %v374 = vsub.f32 %v370, %v373
          %v375 = vlaneseq
          %v376 = vand.u32 %v375, 127
          %vm377 = vcmp.lt.s32.totalorder %v376, 32
          %v378 = vsel %vm377, 1, 0
          %vm379 = vcmp.eq.s32.totalorder %v378, 1
          %v380 = vsel %vm379, %v374, 0.0
          %v381 = vmul.f32 %v380, %v380
          %382 = vadd.xlane.f32.xlu0 %v381
          %v383 = vpop.xlane.xlu0 %382
          %v384 = vmul.f32 %v383, 0.03125
          %v385 = vadd.f32 %v384, 1e-05
          %v386 = vrsqrt.pop %v385
          %v387 = vmul.f32 %v380, %v386
          %v388 = vld [vmem:[%s1] sm:$0x1]
          %v390 = vlaneseq
          %v391 = vshrl.u32 %v390, 7
          %v392 = vsub.s32 0, %v391
          %v393 = vrot.slane %v388, %v392
          %v395 = vmul.f32 %v387, %v393
          %v396 = vld [vmem:[%s2] sm:$0x1]
          %v398 = vlaneseq
          %v399 = vshrl.u32 %v398, 7
          %v400 = vsub.s32 0, %v399
          %v401 = vrot.slane %v396, %v400
          %v403 = vadd.f32 %v395, %v401
          %404 = vst [vmem:[#allocation2] sm:$0xff] %v403
          %v405 = vld [vmem:[%s6] sm:$0x1]
          %v407 = vlaneseq
          %v408 = vshrl.u32 %v407, 7
          %v409 = vsub.s32 0, %v408
          %v410 = vrot.slane %v405, %v409
          %v412 = vadd.f32 %v403, %v410
          %413 = vst [vmem:[#allocation3] sm:$0xff] %v412
        $region64: #{tpu_custom_call.1} parent=47 // pred_fallthru
          _
        %v414 = vld [vmem:[#allocation2] sm:$0xff]
        %v415 = vpack.c.bf16 %v414, %v414
        %v416 = vld [vmem:[#allocation7] sm:$0xf]
        %v417 = vld [vmem:[#allocation7 + $0x4] sm:$0xf]
        %v418 = vld [vmem:[#allocation7 + $0x8] sm:$0xf]
        %v419 = vld [vmem:[#allocation7 + $0xc] sm:$0xf]
        %v420 = vld [vmem:[#allocation7 + $0x10] sm:$0xf]
        %v421 = vld [vmem:[#allocation7 + $0x14] sm:$0xf]
        %v422 = vld [vmem:[#allocation7 + $0x18] sm:$0xf]
        %v423 = vld [vmem:[#allocation7 + $0x1c] sm:$0xf]
        %v424 = vld [vmem:[#allocation7 + $0x20] sm:$0xf]
        %v425 = vld [vmem:[#allocation7 + $0x24] sm:$0xf]
        %v426 = vld [vmem:[#allocation7 + $0x28] sm:$0xf]
        %v427 = vld [vmem:[#allocation7 + $0x2c] sm:$0xf]
        %v428 = vld [vmem:[#allocation7 + $0x30] sm:$0xf]
        %v429 = vld [vmem:[#allocation7 + $0x34] sm:$0xf]
        %v430 = vld [vmem:[#allocation7 + $0x38] sm:$0xf]
        %v431 = vld [vmem:[#allocation7 + $0x3c] sm:$0xf]
        %v432 = vld [vmem:[%s363] sm:$0x1]
        %v434 = vlaneseq
        %v435 = vshrl.u32 %v434, 7
        %v436 = vsub.s32 0, %v435
        %v437 = vrot.slane %v432, %v436
        %v455 = vunpack.c.l.b16 %v416
        %v456 = vunpack.c.l.b16 %v417
        %v457 = vunpack.c.l.b16 %v418
        %v458 = vunpack.c.l.b16 %v419
        %v459 = vunpack.c.l.b16 %v420
        %v460 = vunpack.c.l.b16 %v421
        %v461 = vunpack.c.l.b16 %v422
        %v462 = vunpack.c.l.b16 %v423
        %v463 = vunpack.c.l.b16 %v424
        %v464 = vunpack.c.l.b16 %v425
        %v465 = vunpack.c.l.b16 %v426
        %v466 = vunpack.c.l.b16 %v427
        %v467 = vunpack.c.l.b16 %v428
        %v468 = vunpack.c.l.b16 %v429
        %v469 = vunpack.c.l.b16 %v430
        %v470 = vunpack.c.l.b16 %v431
        %v471 = vpack.c.b16 %v456, %v455
        %v472 = vpack.c.b16 %v458, %v457
        %v473 = vpack.c.b16 %v460, %v459
        %v474 = vpack.c.b16 %v462, %v461
        %v475 = vpack.c.b16 %v464, %v463
        %v476 = vpack.c.b16 %v466, %v465
        %v477 = vpack.c.b16 %v468, %v467
        %v478 = vpack.c.b16 %v470, %v469
        %487 = vmatprep.subr.bf16.mxu0 0
        %488 = vmatpush1.bf16.msra.mxu0 %v478
        %489 = vmatprep.subr.bf16.mxu0 0
        %490 = vmatpush1.bf16.msra.mxu0 %v477
        %491 = vmatprep.subr.bf16.mxu0 0
        %492 = vmatpush1.bf16.msra.mxu0 %v476
        %493 = vmatprep.subr.bf16.mxu0 0
        %494 = vmatpush1.bf16.msra.mxu0 %v475
        %495 = vmatprep.subr.bf16.mxu0 0
        %496 = vmatpush1.bf16.msra.mxu0 %v474
        %497 = vmatprep.subr.bf16.mxu0 0
        %498 = vmatpush1.bf16.msra.mxu0 %v473
        %499 = vmatprep.subr.bf16.mxu0 0
        %500 = vmatpush1.bf16.msra.mxu0 %v472
        %501 = vmatprep.subr.bf16.mxu0 0
        %502 = vmatpush1.bf16.msra.mxu0 %v471
        %503 = vmatprep.subr.bf16.mxu0 0
        %504 = vmatpush2.bf16.msra.mxu0 0
        %505 = vmatprep.subr.bf16.mxu0 0
        %506 = vmatpush2.bf16.msra.mxu0 0
        %507 = vmatprep.subr.bf16.mxu0 0
        %508 = vmatpush2.bf16.msra.mxu0 0
        %509 = vmatprep.subr.bf16.mxu0 0
        %510 = vmatpush2.bf16.msra.mxu0 0
        %511 = vmatprep.subr.bf16.mxu0 0
        %512 = vmatpush2.bf16.msra.mxu0 0
        %513 = vmatprep.subr.bf16.mxu0 0
        %514 = vmatpush2.bf16.msra.mxu0 0
        %515 = vmatprep.subr.bf16.mxu0 0
        %516 = vmatpush2.bf16.msra.mxu0 0
        %517 = vmatprep.subr.bf16.mxu0 0
        %518 = vmatpush2.bf16.msra.mxu0 0
        %519 = vmatprep.mubr.bf16.mxu0 0
        %520 = vmatmul.mubr.bf16.gmra.mxu0 %v415
        %v521 = vpop.f32.mrf.mxu0
        %v522 = vadd.f32 %v437, %v521
        %v523 = vpop.f32.mrf.mxu0
        %v524 = vpop.f32.mrf.mxu0
        %v525 = vpop.f32.mrf.mxu0
        %526 = vdwg.mxu0
        %v527 = vmul.f32 %v522, %v522
        %v528 = vmul.f32 %v522, %v527
        %v529 = vmul.f32 %v528, 0.044715
        %v530 = vadd.f32 %v522, %v529
        %v531 = vmul.f32 %v530, 0.7978846
        %v532 = vtanh.pop %v531
        %v533 = vadd.f32 %v532, 1.0
        %v534 = vmul.f32 %v533, 0.5
        %v535 = vmul.f32 %v522, %v534
        %v536 = vld [vmem:[#allocation3] sm:$0xff]
        %v537 = vpack.c.bf16 %v535, %v535
        %v538 = vld [vmem:[#allocation9] sm:$0xf]
        %v539 = vld [vmem:[#allocation9 + $0x4] sm:$0xf]
        %v540 = vld [vmem:[#allocation9 + $0x8] sm:$0xf]
        %v541 = vld [vmem:[#allocation9 + $0xc] sm:$0xf]
        %v542 = vld [vmem:[#allocation9 + $0x10] sm:$0xf]
        %v543 = vld [vmem:[#allocation9 + $0x14] sm:$0xf]
        %v544 = vld [vmem:[#allocation9 + $0x18] sm:$0xf]
        %v545 = vld [vmem:[#allocation9 + $0x1c] sm:$0xf]
        %v546 = vld [vmem:[#allocation9 + $0x20] sm:$0xf]
        %v547 = vld [vmem:[#allocation9 + $0x24] sm:$0xf]
        %v548 = vld [vmem:[#allocation9 + $0x28] sm:$0xf]
        %v549 = vld [vmem:[#allocation9 + $0x2c] sm:$0xf]
        %v550 = vld [vmem:[#allocation9 + $0x30] sm:$0xf]
        %v551 = vld [vmem:[#allocation9 + $0x34] sm:$0xf]
        %v552 = vld [vmem:[#allocation9 + $0x38] sm:$0xf]
        %v553 = vld [vmem:[#allocation9 + $0x3c] sm:$0xf]
        %v570 = vunpack.c.l.b16 %v538
        %v571 = vunpack.c.l.b16 %v539
        %v572 = vunpack.c.l.b16 %v540
        %v573 = vunpack.c.l.b16 %v541
        %v574 = vunpack.c.l.b16 %v542
        %v575 = vunpack.c.l.b16 %v543
        %v576 = vunpack.c.l.b16 %v544
        %v577 = vunpack.c.l.b16 %v545
        %v578 = vunpack.c.l.b16 %v546
        %v579 = vunpack.c.l.b16 %v547
        %v580 = vunpack.c.l.b16 %v548
        %v581 = vunpack.c.l.b16 %v549
        %v582 = vunpack.c.l.b16 %v550
        %v583 = vunpack.c.l.b16 %v551
        %v584 = vunpack.c.l.b16 %v552
        %v585 = vunpack.c.l.b16 %v553
        %v586 = vpack.c.b16 %v571, %v570
        %v587 = vpack.c.b16 %v573, %v572
        %v588 = vpack.c.b16 %v575, %v574
        %v589 = vpack.c.b16 %v577, %v576
        %v590 = vpack.c.b16 %v579, %v578
        %v591 = vpack.c.b16 %v581, %v580
        %v592 = vpack.c.b16 %v583, %v582
        %v593 = vpack.c.b16 %v585, %v584
        %602 = vmatprep.subr.bf16.mxu0 0
        %603 = vmatpush1.bf16.msra.mxu0 %v593
        %604 = vmatprep.subr.bf16.mxu0 0
        %605 = vmatpush1.bf16.msra.mxu0 %v592
        %606 = vmatprep.subr.bf16.mxu0 0
        %607 = vmatpush1.bf16.msra.mxu0 %v591
        %608 = vmatprep.subr.bf16.mxu0 0
        %609 = vmatpush1.bf16.msra.mxu0 %v590
        %610 = vmatprep.subr.bf16.mxu0 0
        %611 = vmatpush1.bf16.msra.mxu0 %v589
        %612 = vmatprep.subr.bf16.mxu0 0
        %613 = vmatpush1.bf16.msra.mxu0 %v588
        %614 = vmatprep.subr.bf16.mxu0 0
        %615 = vmatpush1.bf16.msra.mxu0 %v587
        %616 = vmatprep.subr.bf16.mxu0 0
        %617 = vmatpush1.bf16.msra.mxu0 %v586
        %618 = vmatprep.subr.bf16.mxu0 0
        %619 = vmatpush2.bf16.msra.mxu0 0
        %620 = vmatprep.subr.bf16.mxu0 0
        %621 = vmatpush2.bf16.msra.mxu0 0
        %622 = vmatprep.subr.bf16.mxu0 0
        %623 = vmatpush2.bf16.msra.mxu0 0
        %624 = vmatprep.subr.bf16.mxu0 0
        %625 = vmatpush2.bf16.msra.mxu0 0
        %626 = vmatprep.subr.bf16.mxu0 0
        %627 = vmatpush2.bf16.msra.mxu0 0
        %628 = vmatprep.subr.bf16.mxu0 0
        %629 = vmatpush2.bf16.msra.mxu0 0
        %630 = vmatprep.subr.bf16.mxu0 0
        %631 = vmatpush2.bf16.msra.mxu0 0
        %632 = vmatprep.subr.bf16.mxu0 0
        %633 = vmatpush2.bf16.msra.mxu0 0
        %634 = vmatprep.mubr.bf16.mxu0 0
        %635 = vmatmul.mubr.bf16.gmra.mxu0 %v537
        %v636 = vpop.f32.mrf.mxu0
        %v637 = vadd.f32 0.0, %v636
        %v638 = vpop.f32.mrf.mxu0
        %v639 = vpop.f32.mrf.mxu0
        %v640 = vpop.f32.mrf.mxu0
        %641 = vdwg.mxu0
        %v642 = vadd.f32 %v536, %v637
        %643 = vst [vmem:[#allocation3] sm:$0xff] %v642
        // Predicated region
        $region65: #{tpu_custom_call.1} parent=47 // pred_check
          %p644 = pneg %p366
        $region66: #{tpu_custom_call.1} parent=47 // pred_check_branch
          %646 = sbr.rel (%p644) target = $region68
        $region67: #{tpu_custom_call.1} parent=47 // pred_region
          %v647 = vld [vmem:[#allocation3] sm:$0xff]
          %648 = vst [vmem:[%s360] sm:$0xff] %v647
        $region68: #{tpu_custom_call.1} parent=47 // pred_fallthru
          _
        %s649 = sand.u32 %s212, 1
        %s650 = scalar_lea.sflag [#allocation6], %s649
        %s651 = sand.u32 %s212, 1
        %s652 = smul.addr %s651, 8
        %s653 = scalar_lea.vmem [#allocation10], %s652
        // Predicated region
        $region69: #{tpu_custom_call.1} parent=47 // pred_check
          %p654 = pneg %p222
        $region70: #{tpu_custom_call.1} parent=47 // pred_check_branch
          %656 = sbr.rel (%p654) target = $region72
        $region71: #{tpu_custom_call.1} parent=47 // pred_region
          %s658 = ssub.s32 128, 128
          %659 = vsyncadd %s650, %s658
          %s660 = smul.addr %s29, 128
          %s661 = scalar_lea.hbm %s7, %s660
          %s663 = sshll.u32 %s653, 4
          %s664 = int_to_ptr.vmem [resolvable:$true] %s663
          %666 = dma.vmem_to_hbm [thread:$0]  %s664, 128, %s661, %s650
        $region72: #{tpu_custom_call.1} parent=47 // pred_fallthru
          _
      $region48: #{tpu_custom_call.1} parent=5 // pred_fallthru
        _
      %p667 = scmp.le.s32.totalorder 2, %s20
      // Predicated region
      $region73: #{tpu_custom_call.1} parent=5 // pred_check
        %p668 = pneg %p667
      $region74: #{tpu_custom_call.1} parent=5 // pred_check_branch
        %670 = sbr.rel (%p668) target = $region76
      $region75: #{tpu_custom_call.1} parent=5 // pred_region
        %s671 = ssub.s32 %s20, 2
        // Predicated region
        $region77: #{tpu_custom_call.1} parent=75 // pred_check
          %p672 = pneg %p228
        $region78: #{tpu_custom_call.1} parent=75 // pred_check_branch
          %674 = sbr.rel (%p672) target = $region80
        $region79: #{tpu_custom_call.1} parent=75 // pred_region
          %s675 = sand.u32 %s213, 1
          %s676 = scalar_lea.sflag [#allocation6], %s675
          %s677 = sand.u32 %s213, 1
          %s678 = smul.addr %s677, 8
          %s679 = scalar_lea.vmem [#allocation10], %s678
          %680 = dma.done %s676, 128
        $region80: #{tpu_custom_call.1} parent=75 // pred_fallthru
          _
      $region76: #{tpu_custom_call.1} parent=5 // pred_fallthru
        _
    $region6: #{tpu_custom_call.1} parent=1 // loop_footer
      %s24 = sadd.s32 1, %s20
    $region7: #{tpu_custom_call.1} parent=1 // loop_footer_branch
      %19 = sbr.rel target = $region3
    $region8: #{tpu_custom_call.1} parent=1 // loop_exit
      _
    %681 = vsyncpa [#allocation5], 1
    %s682 = scalar_lea.sflag [#allocation5], 1
    %683 = vsyncpa %s682, 1
    %684 = vsyncpa [#allocation8], 1
    %685 = vsyncpa [#allocation6], 1
    %s686 = scalar_lea.sflag [#allocation6], 1
    %687 = vsyncpa %s686, 1

</llo_original>
